<compile_context>
chip_gen: v7x
topology: tpu7x:2x2x1
jax: 0.10.0
libtpu: 0.0.40
codegen_flags: <defaults>
</compile_context>

<pallas_src>
import jax
import jax.numpy as jnp
from jax.experimental import pallas as pl
from jax.experimental.pallas import tpu as pltpu


def _copy_kernel(x_ref, o_ref):
    # Pure streaming copy: the squeeze is expressed in the wrapper/BlockSpecs;
    # the kernel moves lane-dense (rows, cols) tiles HBM -> VMEM -> HBM.
    o_ref[...] = x_ref[...]


def _vmem_budget_bytes():
    """Budget for double-buffered in+out blocks (~4x one tile)."""
    try:
        cap = pltpu.get_tpu_info().vmem_capacity_bytes
    except Exception:
        cap = 64 << 20  # assume the smallest generation (v7x: 64 MiB) if unknown
    # Keep well under the default scoped-VMEM limit on every generation
    # (16 MiB v5e, 32 MiB v6e/v7x): 8 MiB budget -> 2 MiB per-side tile.
    return min(8 << 20, cap // 8)


def _pick_lane_width(total_elems):
    """Largest wide lane-dense width (multiple of 128) dividing the flat size."""
    for lane in (4096, 2048, 1024, 512, 256, 128):
        if total_elems % lane == 0:
            return lane
    return None


def _pick_block_rows(n_rows, row_bytes, itemsize, budget_bytes):
    """Largest row tile with double-buffered in+out (~4x tile) inside budget.

    No exact-divisor requirement: the caller uses cdiv + masked edge blocks.
    Rounded to a dtype-aware sublane multiple (8 f32, 16 bf16, 32 int8/fp8).
    """
    max_rows = budget_bytes // (4 * row_bytes)
    if n_rows <= max_rows:
        return n_rows  # full extent is always a legal block dim
    sublane = max(8, 32 // max(1, itemsize))
    return max(sublane, (max_rows // sublane) * sublane)


def squeeze_channels(x: jax.Array, *, force_kernel: bool = False,
                     min_kernel_bytes: int = 1 << 20) -> jax.Array:
    """Pallas equivalent of SqueezeChannels()(x): squeezes dim 2 of a 3-D tensor."""
    assert x.ndim == 3, "SqueezeChannels expects a 3-D (B, C, T) tensor"
    B, C, T = x.shape
    if T != 1:
        # torch.Tensor.squeeze(2) is a no-op when dim 2 is not of size 1.
        return x

    itemsize = jnp.dtype(x.dtype).itemsize
    total = B * C
    nbytes = total * itemsize

    if not force_kernel and nbytes < min_kernel_bytes:
        # The squeeze is pure metadata on a contiguous array: free, no HBM
        # round trip, no kernel launch. This is the path the real causalnet
        # shape (B, C, 1) after AdaptiveMaxPool1d(1) always takes.
        return x.reshape(B, C)

    # Materializing copy requested: present a lane-dense 2-D slab to the kernel.
    if C % 128 == 0:
        rows, cols = B, C
    else:
        lane = _pick_lane_width(total)
        if lane is not None:
            rows, cols = total // lane, lane   # wide slab -> unmasked full-width vst
        else:
            rows, cols = B, C                  # fallback: full-extent last dim

    x2d = x.reshape(rows, cols)                # metadata-only reshape (contiguous)

    bB = _pick_block_rows(rows, cols * itemsize, itemsize, _vmem_budget_bytes())
    grid = (pl.cdiv(rows, bB),)                # ragged last block is masked by Pallas

    out2d = pl.pallas_call(
        _copy_kernel,
        out_shape=jax.ShapeDtypeStruct((rows, cols), x.dtype),
        grid=grid,
        in_specs=[pl.BlockSpec((bB, cols), lambda i: (i, 0))],
        out_specs=pl.BlockSpec((bB, cols), lambda i: (i, 0)),
        input_output_aliases={0: 0},
        compiler_params=pltpu.CompilerParams(
            dimension_semantics=("parallel",),
        ),
        cost_estimate=pl.CostEstimate(
            flops=0, transcendentals=0, bytes_accessed=2 * nbytes),
    )(x2d)

    return out2d.reshape(B, C)


if __name__ == "__main__":
    key = jax.random.PRNGKey(0)
    k_small, k_kernel, k_noop = jax.random.split(key, 3)

    # 1) Real causalnet usage: (batch, channels, 1) right after AdaptiveMaxPool1d(1).
    #    Small tensor -> free metadata path (no pallas_call, zero HBM traffic).
    B, C = 2, 128
    x_small = jax.random.normal(k_small, (B, C, 1), dtype=jnp.float32)
    out_small = squeeze_channels(x_small)
    jax.block_until_ready(out_small)
    assert out_small.shape == (B, C), out_small.shape
    assert out_small.dtype == x_small.dtype
    assert jnp.array_equal(out_small, jnp.squeeze(x_small, axis=2))

    # 2) Exercise the Pallas streaming-copy path once (C=96 is not a multiple of
    #    128, so it takes the lane-dense flatten route).
    B2, C2 = 16, 96
    x_k = jax.random.normal(k_kernel, (B2, C2, 1), dtype=jnp.float32)
    out_k = squeeze_channels(x_k, force_kernel=True)
    jax.block_until_ready(out_k)
    assert out_k.shape == (B2, C2), out_k.shape
    assert out_k.dtype == x_k.dtype
    assert jnp.array_equal(out_k, jnp.squeeze(x_k, axis=2)), "Mismatch vs reference squeeze"

    # 3) torch.squeeze(2) no-op semantics when dim 2 is not of size 1.
    x_noop = jax.random.normal(k_noop, (2, 4, 16), dtype=jnp.float32)
    out_noop = squeeze_channels(x_noop)
    jax.block_until_ready(out_noop)
    assert out_noop.shape == x_noop.shape
    assert jnp.array_equal(out_noop, x_noop)

    print("KERNEL_OK")
</pallas_src>

<mosaic_0001>
module attributes {stable_mosaic.version = 11 : i64} {
  func.func @_copy_kernel(%arg0: i32, %arg1: memref<3x512xf32, #tpu.memory_space<vmem>>, %arg2: memref<3x512xf32, #tpu.memory_space<vmem>>) attributes {dimension_semantics = [#tpu.dimension_semantics<parallel>], iteration_bounds = array<i64: 1>, scalar_prefetch = 0 : i64, scratch_operands = 0 : i64, tpu.core_type = #tpu.core_type<tc>, window_params = [{transform_indices = @transform_0, window_bounds = array<i64: 3, 512>}, {transform_indices = @transform_1, window_bounds = array<i64: 3, 512>}]} {
    %c0 = arith.constant 0 : index
    %c0_0 = arith.constant 0 : index
    %0 = vector.load %arg1[%c0, %c0_0] : memref<3x512xf32, #tpu.memory_space<vmem>>, vector<3x512xf32>
    %c0_1 = arith.constant 0 : index
    %c0_2 = arith.constant 0 : index
    %1 = vector.load %arg2[%c0_1, %c0_2] : memref<3x512xf32, #tpu.memory_space<vmem>>, vector<3x512xf32>
    tpu.vector_store %arg2[%c0_1, %c0_2], %0 {strides = array<i32>} : memref<3x512xf32, #tpu.memory_space<vmem>>, vector<3x512xf32>,
    return
  }
  func.func @transform_0(%arg0: i32) -> (i32, i32) {
    %c0_i32 = arith.constant 0 : i32
    %c0_i32_0 = arith.constant 0 : i32
    return %arg0, %c0_i32 : i32, i32
  }
  func.func @transform_1(%arg0: i32) -> (i32, i32) {
    %c0_i32 = arith.constant 0 : i32
    %c0_i32_0 = arith.constant 0 : i32
    return %arg0, %c0_i32 : i32, i32
  }
}

</mosaic_0001>

<llo_original>
// kernel: tpu_custom_call.1
$region0: #{tpu_custom_call.1}
  #allocation0 [shape = 'u32[]', space=smem, size = 0x4, offset = 0x4, fixed_abs, tag = 'smem constant byte address 0x4 - core index']
  #allocation1 [shape = 'u32[144,128]{1,0:T(1,128)}', space=vmem, size = 0x12000, scoped, tag = 'internal scratch']
  %s0 = inlined_call_operand.hbm [shape: f32[3,512], index: 0, kind: input, shape index: {}, may-alias: {0,1}]
  %s1 = inlined_call_operand.hbm [shape: f32[3,512], index: 1, kind: output, shape index: {}, may-alias: {0,1}]
  %s2 = sld [smem:[#allocation0]]
  $region18: #{tpu_custom_call.1} parent=0
    _
  %s4 = ssub.s32 1, %s2
  %s5 = scalar_select 0, %s4, %s2
  $region1: #{tpu_custom_call.1} parent=0
    #allocation2 [shape = 'u8[8192]{0}', space=vmem, size = 0x2000, scoped, tag = 'input window, operand 0, single buffered']
    #allocation3 [shape = 's32[1]{0}', space=sflag, size = 0x4, scoped, tag = 'scoped memory for tpu_custom_call.1']
    #allocation4 [shape = 's32[1]{0}', space=sflag, size = 0x4, scoped, tag = 'scoped memory for tpu_custom_call.1']
    #allocation5 [shape = 'u8[8192]{0}', space=vmem, size = 0x2000, scoped, tag = 'output window, operand 0, single buffered']
    %6 = vsyncpa [#allocation3], 0
    %7 = vsyncpa [#allocation4], 0
    // Predicated region
    $region2: #{tpu_custom_call.1} parent=1 // pred_check
      _
    $region3: #{tpu_custom_call.1} parent=1 // pred_check_branch
      %9 = sbr.rel (0) target = $region5
    $region4: #{tpu_custom_call.1} parent=1 // pred_region
      %s11 = ssub.s32 256, 256
      %12 = vsyncadd [#allocation3], %s11
      %s14 = sshll.u32 [#allocation2], 4
      %s15 = int_to_ptr.vmem [resolvable:$true] %s14
      %17 = dma.hbm_to_vmem [thread:$0]  %s0, 256, %s15, [#allocation3]
    $region5: #{tpu_custom_call.1} parent=1 // pred_fallthru
      _
    // Predicated region
    $region6: #{tpu_custom_call.1} parent=1 // pred_check
      _
    $region7: #{tpu_custom_call.1} parent=1 // pred_check_branch
      %19 = sbr.rel (0) target = $region9
    $region8: #{tpu_custom_call.1} parent=1 // pred_region
      %20 = dma.done [#allocation3], 256
    $region9: #{tpu_custom_call.1} parent=1 // pred_fallthru
      _
    %v21 = vld [vmem:[#allocation2] sm:$0x77]
    %v22 = vld [vmem:[#allocation2 + $0x8] sm:$0x77]
    %23 = vst [vmem:[#allocation5] sm:$0x77] %v21
    %24 = vst [vmem:[#allocation5 + $0x8] sm:$0x77] %v22
    // Predicated region
    $region10: #{tpu_custom_call.1} parent=1 // pred_check
      _
    $region11: #{tpu_custom_call.1} parent=1 // pred_check_branch
      %26 = sbr.rel (0) target = $region13
    $region12: #{tpu_custom_call.1} parent=1 // pred_region
      %s28 = ssub.s32 256, 256
      %29 = vsyncadd [#allocation4], %s28
      %s31 = sshll.u32 [#allocation5], 4
      %s32 = int_to_ptr.vmem [resolvable:$true] %s31
      %34 = dma.vmem_to_hbm [thread:$0]  %s32, 256, %s1, [#allocation4]
    $region13: #{tpu_custom_call.1} parent=1 // pred_fallthru
      _
    // Predicated region
    $region14: #{tpu_custom_call.1} parent=1 // pred_check
      _
    $region15: #{tpu_custom_call.1} parent=1 // pred_check_branch
      %36 = sbr.rel (0) target = $region17
    $region16: #{tpu_custom_call.1} parent=1 // pred_region
      %37 = dma.done [#allocation4], 256
    $region17: #{tpu_custom_call.1} parent=1 // pred_fallthru
      _
    %38 = vsyncpa [#allocation3], 1
    %39 = vsyncpa [#allocation4], 1

</llo_original>
